<compile_context>
chip_gen: v5e
topology: v5e:2x2
jax: 0.10.0
libtpu: 0.0.40
codegen_flags: <defaults>
</compile_context>

<pallas_src>
import functools
import math

import jax
import jax.numpy as jnp
from jax.experimental import pallas as pl
from jax.experimental.pallas import tpu as pltpu

_EPS = 1e-5                       # nn.LayerNorm default
_GELU_C = math.sqrt(2.0 / math.pi)


def _round_up(x, m):
    return ((x + m - 1) // m) * m


def _gelu_tanh(x):
    # Identical to the module's own GELU_ fallback (tanh approximation).
    # TODO(synk): torch picks nn.GELU (exact erf) when available; erf has no
    # clean Mosaic lowering, so the module's tanh approximation is used instead.
    return 0.5 * x * (1.0 + jnp.tanh(_GELU_C * (x + 0.044715 * x * x * x)))


# ----------------------------------------------------------------------------
# LayerNorm kernel
# ----------------------------------------------------------------------------
def _layernorm_kernel(x_ref, gb_ref, o_ref):
    """LayerNorm over the last axis of a (row_tile, D) tile (torch semantics)."""
    x = x_ref[...].astype(jnp.float32)
    inv_d = 1.0 / x.shape[-1]
    mean = jnp.sum(x, axis=-1, keepdims=True) * inv_d
    xc = x - mean
    # two-pass (centered) variance kept on purpose: more stable than sum/sumsq,
    # and the extra elementwise pass is free in this HBM-bound kernel.
    var = jnp.sum(xc * xc, axis=-1, keepdims=True) * inv_d
    y = xc * jax.lax.rsqrt(var + _EPS)
    o_ref[...] = (y * gb_ref[0:1, :] + gb_ref[1:2, :]).astype(o_ref.dtype)


def layernorm_pallas(x, gamma, beta, *, row_tile=None,
                     vmem_budget_bytes=8 * 1024 * 1024):
    """LayerNorm over the last dim of x (any leading shape); gamma/beta: (D,).

    Rows are flattened to (rows, D) and tiled along rows with the largest tile
    fitting the VMEM budget (double-buffered input + output ~= 4*row_tile*D*itemsize).
    D stays whole, so the output slab is lane-dense whenever D is a multiple of
    128 (keep it so in deployed configs; smaller D still works, just with
    masked partial stores).
    """
    *lead, D = x.shape
    rows = 1
    for s in lead:
        rows *= s
    x2 = x.reshape(rows, D)
    itemsize = x2.dtype.itemsize
    sub = {4: 8, 2: 16, 1: 32}.get(itemsize, 8)   # sublane packing per dtype

    if row_tile is None:
        cap = max(sub, vmem_budget_bytes // (4 * D * itemsize))
        row_tile = (cap // sub) * sub
        row_tile = min(row_tile, _round_up(rows, sub))
        # Keep >= 2 grid steps when possible so the "parallel" axis can be
        # sharded across the two TensorCores of a v7x chip.
        if row_tile >= rows and rows > sub:
            row_tile = _round_up(pl.cdiv(rows, 2), sub)
    row_tile = max(sub, _round_up(row_tile, sub))

    rows_p = _round_up(rows, row_tile)            # cdiv-style padding, no assert
    if rows_p != rows:
        x2 = jnp.pad(x2, ((0, rows_p - rows), (0, 0)))

    # pre-cast affine params once in the wrapper: (2, D) f32, gamma row 0, beta row 1
    gb = jnp.stack([gamma.astype(jnp.float32), beta.astype(jnp.float32)], axis=0)

    footprint = 4 * row_tile * D * itemsize + 2 * D * 4
    vmem_limit = int(min(100 * 2**20, max(32 * 2**20, footprint * 3 // 2)))

    out = pl.pallas_call(
        _layernorm_kernel,
        out_shape=jax.ShapeDtypeStruct((rows_p, D), x.dtype),
        grid_spec=pl.GridSpec(
            grid=(rows_p // row_tile,),
            in_specs=[
                pl.BlockSpec((row_tile, D), lambda i: (i, 0)),
                pl.BlockSpec((2, D), lambda i: (0, 0)),
            ],
            out_specs=pl.BlockSpec((row_tile, D), lambda i: (i, 0)),
        ),
        compiler_params=pltpu.CompilerParams(
            dimension_semantics=("parallel",),
            vmem_limit_bytes=vmem_limit),
    )(x2, gb)
    if rows_p != rows:
        out = out[:rows]
    return out.reshape(*lead, D)


# ----------------------------------------------------------------------------
# Fused Linear (+ bias + optional GELU + optional residual) kernel
# ----------------------------------------------------------------------------
def _linear_kernel(*refs, activation, has_residual):
    if has_residual:
        x_ref, w_ref, b_ref, r_ref, o_ref, acc_ref = refs
    else:
        x_ref, w_ref, b_ref, o_ref, acc_ref = refs
    kk = pl.program_id(2)

    @pl.when(kk == 0)
    def _():
        acc_ref[...] = jnp.zeros_like(acc_ref)

    acc_ref[...] += jnp.dot(x_ref[...], w_ref[...],
                            preferred_element_type=jnp.float32)

    @pl.when(kk == pl.num_programs(2) - 1)
    def _():
        y = acc_ref[...] + b_ref[...]
        if activation == "gelu":
            y = _gelu_tanh(y)
        if has_residual:
            y = y + r_ref[...].astype(jnp.float32)
        o_ref[...] = y.astype(o_ref.dtype)


def linear_pallas(x, w, bias=None, *, activation=None, residual=None,
                  tm=256, tn=256, tk=256):
    """y = act(x @ w + bias) [+ residual], with (M,K,N) padded to tile multiples."""
    M, K = x.shape
    _, N = w.shape
    tm = min(tm, _round_up(M, 8))
    tn = min(tn, _round_up(N, 128))
    tk = min(tk, _round_up(K, 128))
    Mp, Np, Kp = _round_up(M, tm), _round_up(N, tn), _round_up(K, tk)

    xp = jnp.pad(x, ((0, Mp - M), (0, Kp - K))) if (Mp, Kp) != (M, K) else x
    wp = jnp.pad(w, ((0, Kp - K), (0, Np - N))) if (Kp, Np) != (K, N) else w
    b_arr = bias if bias is not None else jnp.zeros((N,), jnp.float32)
    bp = jnp.pad(b_arr.astype(jnp.float32), (0, Np - N)).reshape(1, Np)

    has_res = residual is not None
    inputs = [xp, wp, bp]
    in_specs = [
        pl.BlockSpec((tm, tk), lambda i, j, kk: (i, kk)),
        pl.BlockSpec((tk, tn), lambda i, j, kk: (kk, j)),
        pl.BlockSpec((1, tn), lambda i, j, kk: (0, j)),
    ]
    if has_res:
        rp = (jnp.pad(residual, ((0, Mp - M), (0, Np - N)))
              if residual.shape != (Mp, Np) else residual)
        inputs.append(rp)
        # block index independent of kk -> fetched once per (i, j), not per k-step
        in_specs.append(pl.BlockSpec((tm, tn), lambda i, j, kk: (i, j)))

    kernel = functools.partial(_linear_kernel, activation=activation,
                               has_residual=has_res)
    out = pl.pallas_call(
        kernel,
        out_shape=jax.ShapeDtypeStruct((Mp, Np), x.dtype),
        grid=(Mp // tm, Np // tn, Kp // tk),
        in_specs=in_specs,
        out_specs=pl.BlockSpec((tm, tn), lambda i, j, kk: (i, j)),
        scratch_shapes=[pltpu.VMEM((tm, tn), jnp.float32)],
        compiler_params=pltpu.CompilerParams(
            dimension_semantics=("parallel", "parallel", "arbitrary")),
    )(*inputs)
    return out[:M, :N]


# ----------------------------------------------------------------------------
# Pure-JAX building blocks (reference path)
# ----------------------------------------------------------------------------
def _dense_ref(x, w, bias=None, *, activation=None, residual=None):
    y = jnp.dot(x, w, precision=jax.lax.Precision.HIGHEST)
    if bias is not None:
        y = y + bias
    if activation == "gelu":
        y = _gelu_tanh(y)
    if residual is not None:
        y = y + residual
    return y


def _layernorm_ref(x, gamma, beta):
    mean = jnp.mean(x, axis=-1, keepdims=True)
    var = jnp.mean((x - mean) ** 2, axis=-1, keepdims=True)
    return (x - mean) * jax.lax.rsqrt(var + _EPS) * gamma + beta


# ----------------------------------------------------------------------------
# LinformerCA forward (shared between Pallas path and pure-JAX reference)
# ----------------------------------------------------------------------------
def linformer_ca_forward(params, x1, x, *, dense, layernorm):
    cfg = params["config"]
    h, dh, klin = cfg["heads"], cfg["dim_head"], cfg["k"]
    b, n, d = x.shape

    for lp in params["layers"]:
        # ---- PreNormCross(dim, LinformerCrossAttention)(x1, x) ----
        xn = layernorm(x, lp["ln1_g"], lp["ln1_b"])
        q = dense(x1.reshape(b, d), lp["wq"])                               # (b, h*dh)
        keys = dense(xn.reshape(b * n, d), lp["wk"]).reshape(b, n, h * dh)
        vals = dense(xn.reshape(b * n, d), lp["wv"]).reshape(b, n, h * dh)
        # TODO(synk): the low-rank sequence projection and the length-1-query
        # softmax core are tiny (O(b*k*dim)); left to XLA rather than Pallas.
        keys = jnp.einsum("bnd,nk->bkd", keys, lp["proj_k"],
                          precision=jax.lax.Precision.HIGHEST)
        vals = jnp.einsum("bnd,nk->bkd", vals, lp["proj_v"],
                          precision=jax.lax.Precision.HIGHEST)
        qh = q.reshape(b, h, dh)
        kh = keys.reshape(b, klin, h, dh).transpose(0, 2, 1, 3)             # (b,h,k,dh)
        vh = vals.reshape(b, klin, h, dh).transpose(0, 2, 1, 3)
        dots = jnp.einsum("bhd,bhkd->bhk", qh, kh,
                          precision=jax.lax.Precision.HIGHEST) * (dh ** -0.5)
        attn = jax.nn.softmax(dots, axis=-1)
        out = jnp.einsum("bhk,bhkd->bhd", attn, vh,
                         precision=jax.lax.Precision.HIGHEST).reshape(b, h * dh)
        attn_out = dense(out, lp["wo"], lp["bo"]).reshape(b, 1, d)
        x = x + attn_out                                                    # residual

        # ---- PreNorm(dim, FeedForward)(x) + residual (fused into w2 epilogue) ----
        xn2 = layernorm(x, lp["ln2_g"], lp["ln2_b"])
        h1 = dense(xn2.reshape(b * n, d), lp["w1"], lp["b1"], activation="gelu")
        x = dense(h1, lp["w2"], lp["b2"], residual=x.reshape(b * n, d)).reshape(b, n, d)
    return x


# ----------------------------------------------------------------------------
# Deterministic parameter init (mirrors the PyTorch module structure)
# ----------------------------------------------------------------------------
def init_linformer_ca_params(key, *, dim, seq_len, depth, k=256, heads=8,
                             dim_head=None, dtype=jnp.float32):
    dim_head = dim // heads if dim_head is None else dim_head

    def lin(kk, fan_in, fan_out, bias=True):
        k1, k2 = jax.random.split(kk)
        s = 1.0 / math.sqrt(fan_in)
        w = jax.random.uniform(k1, (fan_in, fan_out), dtype, -s, s)
        b = jax.random.uniform(k2, (fan_out,), dtype, -s, s) if bias else None
        return w, b

    layers = []
    for _ in range(depth):
        key, *ks = jax.random.split(key, 9)
        wq, _ = lin(ks[0], dim, heads * dim_head, bias=False)
        wk, _ = lin(ks[1], dim, heads * dim_head, bias=False)
        wv, _ = lin(ks[2], dim, heads * dim_head, bias=False)
        sk = 1.0 / math.sqrt(k)
        proj_k = jax.random.uniform(ks[3], (seq_len, k), dtype, -sk, sk)
        proj_v = jax.random.uniform(ks[4], (seq_len, k), dtype, -sk, sk)
        wo, bo = lin(ks[5], heads * dim_head, dim)
        w1, b1 = lin(ks[6], dim, dim * 4)
        w2, b2 = lin(ks[7], dim * 4, dim)
        layers.append(dict(
            ln1_g=jnp.ones((dim,), dtype), ln1_b=jnp.zeros((dim,), dtype),
            ln2_g=jnp.ones((dim,), dtype), ln2_b=jnp.zeros((dim,), dtype),
            wq=wq, wk=wk, wv=wv, proj_k=proj_k, proj_v=proj_v,
            wo=wo, bo=bo, w1=w1, b1=b1, w2=w2, b2=b2))
    return dict(config=dict(heads=heads, dim_head=dim_head, k=k), layers=layers)


if __name__ == "__main__":
    # small but representative: dim multiple of 128 keeps the LN output lane-dense
    B, N, D = 2, 8, 128
    HEADS, K_LIN, DEPTH = 4, 8, 2

    key = jax.random.PRNGKey(0)
    kp, k1, k2 = jax.random.split(key, 3)
    params = init_linformer_ca_params(kp, dim=D, seq_len=N, depth=DEPTH,
                                      k=K_LIN, heads=HEADS)
    x1 = jax.random.normal(k1, (B, 1, D), jnp.float32)   # single query token (CA)
    x = jax.random.normal(k2, (B, N, D), jnp.float32)

    out = linformer_ca_forward(params, x1, x,
                               dense=linear_pallas, layernorm=layernorm_pallas)
    out = jax.block_until_ready(out)

    ref = linformer_ca_forward(params, x1, x,
                               dense=_dense_ref, layernorm=_layernorm_ref)
    assert out.shape == (B, N, D)
    err = float(jnp.max(jnp.abs(out - ref)))
    assert err < 2e-3, f"max abs error vs reference: {err}"

    print("KERNEL_OK")
</pallas_src>

<mosaic_0001>
module attributes {stable_mosaic.version = 11 : i64} {
  func.func @_layernorm_kernel(%arg0: i32, %arg1: memref<8x128xf32, #tpu.memory_space<vmem>>, %arg2: memref<2x128xf32, #tpu.memory_space<vmem>>, %arg3: memref<8x128xf32, #tpu.memory_space<vmem>>) attributes {dimension_semantics = [#tpu.dimension_semantics<parallel>], iteration_bounds = array<i64: 2>, scalar_prefetch = 0 : i64, scratch_operands = 0 : i64, tpu.core_type = #tpu.core_type<tc>, window_params = [{transform_indices = @transform_0, window_bounds = array<i64: 8, 128>}, {pipeline_mode = #tpu.pipeline_mode<synchronous>, transform_indices = @transform_1, window_bounds = array<i64: 2, 128>}, {transform_indices = @transform_2, window_bounds = array<i64: 8, 128>}]} {
    %c0 = arith.constant 0 : index
    %c0_0 = arith.constant 0 : index
    %0 = vector.load %arg1[%c0, %c0_0] : memref<8x128xf32, #tpu.memory_space<vmem>>, vector<8x128xf32>
    %cst = arith.constant dense<0.000000e+00> : vector<8xf32>
    %1 = vector.multi_reduction <add>, %0, %cst [1] : vector<8x128xf32> to vector<8xf32>
    %2 = vector.shape_cast %1 : vector<8xf32> to vector<8x1xf32>
    %cst_1 = arith.constant 7.812500e-03 : f32
    %3 = vector.broadcast %cst_1 : f32 to vector<8x1xf32>
    %4 = arith.mulf %2, %3 : vector<8x1xf32>
    %5 = vector.broadcast %4 : vector<8x1xf32> to vector<8x128xf32>
    %6 = arith.subf %0, %5 : vector<8x128xf32>
    %7 = arith.mulf %6, %6 : vector<8x128xf32>
    %cst_2 = arith.constant dense<0.000000e+00> : vector<8xf32>
    %8 = vector.multi_reduction <add>, %7, %cst_2 [1] : vector<8x128xf32> to vector<8xf32>
    %9 = vector.shape_cast %8 : vector<8xf32> to vector<8x1xf32>
    %cst_3 = arith.constant 7.812500e-03 : f32
    %10 = vector.broadcast %cst_3 : f32 to vector<8x1xf32>
    %11 = arith.mulf %9, %10 : vector<8x1xf32>
    %cst_4 = arith.constant 9.99999974E-6 : f32
    %12 = vector.broadcast %cst_4 : f32 to vector<8x1xf32>
    %13 = arith.addf %11, %12 : vector<8x1xf32>
    %14 = math.rsqrt %13 : vector<8x1xf32>
    %15 = vector.broadcast %14 : vector<8x1xf32> to vector<8x128xf32>
    %16 = arith.mulf %6, %15 : vector<8x128xf32>
    %c0_5 = arith.constant 0 : index
    %c0_6 = arith.constant 0 : index
    %17 = vector.load %arg2[%c0_5, %c0_6] : memref<2x128xf32, #tpu.memory_space<vmem>>, vector<1x128xf32>
    %18 = vector.broadcast %17 : vector<1x128xf32> to vector<8x128xf32>
    %19 = arith.mulf %16, %18 : vector<8x128xf32>
    %c1 = arith.constant 1 : index
    %c0_7 = arith.constant 0 : index
    %20 = vector.load %arg2[%c1, %c0_7] : memref<2x128xf32, #tpu.memory_space<vmem>>, vector<1x128xf32>
    %21 = vector.broadcast %20 : vector<1x128xf32> to vector<8x128xf32>
    %22 = arith.addf %19, %21 : vector<8x128xf32>
    %c0_8 = arith.constant 0 : index
    %c0_9 = arith.constant 0 : index
    %23 = vector.load %arg3[%c0_8, %c0_9] : memref<8x128xf32, #tpu.memory_space<vmem>>, vector<8x128xf32>
    tpu.vector_store %arg3[%c0_8, %c0_9], %22 {strides = array<i32>} : memref<8x128xf32, #tpu.memory_space<vmem>>, vector<8x128xf32>,
    return
  }
  func.func @transform_0(%arg0: i32) -> (i32, i32) {
    %c0_i32 = arith.constant 0 : i32
    %c0_i32_0 = arith.constant 0 : i32
    return %arg0, %c0_i32 : i32, i32
  }
  func.func @transform_1(%arg0: i32) -> (i32, i32) {
    %c0_i32 = arith.constant 0 : i32
    %c0_i32_0 = arith.constant 0 : i32
    %c0_i32_1 = arith.constant 0 : i32
    return %c0_i32, %c0_i32_0 : i32, i32
  }
  func.func @transform_2(%arg0: i32) -> (i32, i32) {
    %c0_i32 = arith.constant 0 : i32
    %c0_i32_0 = arith.constant 0 : i32
    return %arg0, %c0_i32 : i32, i32
  }
}

</mosaic_0001>

<llo_original>
// kernel: tpu_custom_call.1
$region0: #{tpu_custom_call.1}
  #allocation0 [shape = 'u32[]', space=smem, size = 0x4, offset = 0x4, fixed_abs, tag = 'smem constant byte address 0x4 - core index']
  #allocation1 [shape = 'u32[72,128]{1,0:T(1,128)}', space=vmem, size = 0x9000, scoped, tag = 'internal scratch']
  %s0 = inlined_call_operand.hbm [shape: f32[16,128], index: 0, kind: input, shape index: {}]
  %s1 = inlined_call_operand.hbm [shape: f32[2,128], index: 1, kind: input, shape index: {}]
  %s2 = inlined_call_operand.hbm [shape: f32[16,128], index: 2, kind: output, shape index: {}]
  %s3 = sld [smem:[#allocation0]]
  $region49: #{tpu_custom_call.1} parent=0
    _
  %s5 = ssub.s32 1, %s3
  %s6 = scalar_select 0, %s5, %s3
  $region1: #{tpu_custom_call.1} parent=0
    #allocation2 [shape = 'u8[8192]{0}', space=vmem, size = 0x2000, scoped, tag = 'input window, operand 0']
    #allocation3 [shape = 's32[2]{0}', space=sflag, size = 0x8, scoped, tag = 'scoped memory for tpu_custom_call.1']
    #allocation4 [shape = 's32[2]{0}', space=sflag, size = 0x8, scoped, tag = 'scoped memory for tpu_custom_call.1']
    #allocation5 [shape = 'u8[1024]{0}', space=vmem, size = 0x400, scoped, tag = 'input window, operand 1, single buffered']
    #allocation6 [shape = 's32[1]{0}', space=sflag, size = 0x4, scoped, tag = 'scoped memory for tpu_custom_call.1']
    #allocation7 [shape = 'u8[8192]{0}', space=vmem, size = 0x2000, scoped, tag = 'output window, operand 0']
    %7 = vsyncpa [#allocation3], 0
    %s8 = scalar_lea.sflag [#allocation3], 1
    %9 = vsyncpa %s8, 0
    %10 = vsyncpa [#allocation6], 0
    %11 = vsyncpa [#allocation4], 0
    %s12 = scalar_lea.sflag [#allocation4], 1
    %13 = vsyncpa %s12, 0
    loop: start=0, step=1, limit=4
    $region2: #{tpu_custom_call.1} parent=1 // loop_pre_header
      _
    $region3: #{tpu_custom_call.1} parent=1 // loop_header
      %s15 = sphi 0, %s19
      %p16 = scmp.ge.s32.totalorder %s15, 4
      %s25 = sphi 0, %s27
      %s28 = sphi 0, %s25
      %s29 = sphi 0, %s28
      %s45 = sphi 0, %s29
      %s49 = sphi 0, %s49
      %s51 = sphi 0, %s49
      %s52 = sphi 0, %s51
      %s66 = sphi 0, %s52
      %s72 = sphi 0, %s74
      %s75 = sphi 0, %s72
      %s76 = sphi 0, %s75
      %s92 = sphi 0, %s76
    $region4: #{tpu_custom_call.1} parent=1 // loop_header_branch
      %18 = sbr.rel (%p16) target = $region8
    $region5: #{tpu_custom_call.1} parent=1 // loop_body
      %s20 = ssub.s32 %s15, 1
      %s21 = ssub.s32 %s15, 2
      %s22 = sadd.s32 %s15, 1
      %s23 = ssub.s32 %s15, %s22
      %p24 = scmp.eq.s32.totalorder %s23, 0
      %s26 = sadd.s32 %s25, 1
      %s27 = scalar_select %p24, %s25, %s26
      %p30 = pneg %p24
      %p31 = scmp.eq.s32.totalorder %s15, 1
      %p32 = por %p30, %p31
      %p33 = scmp.ne.s32.totalorder %s25, %s28
      %p34 = scmp.eq.s32.totalorder %s15, 0
      %p35 = por %p33, %p34
      %p36 = scmp.ne.s32.totalorder %s25, %s28
      %p37 = scmp.eq.s32.totalorder %s20, 1
      %p38 = por %p36, %p37
      %p39 = scmp.ne.s32.totalorder %s28, %s29
      %p40 = scmp.eq.s32.totalorder %s20, 0
      %p41 = por %p39, %p40
      %p42 = scmp.ne.s32.totalorder %s28, %s29
      %p43 = scmp.eq.s32.totalorder %s21, 1
      %p44 = por %p42, %p43
      %p46 = scmp.ne.s32.totalorder %s29, %s45
      %p47 = scmp.eq.s32.totalorder %s21, 0
      %p48 = por %p46, %p47
      %s50 = sadd.s32 %s49, 1
      %p53 = scmp.eq.s32.totalorder %s15, 1
      %p54 = scmp.ne.s32.totalorder %s49, %s51
      %p55 = scmp.eq.s32.totalorder %s15, 0
      %p56 = por %p54, %p55
      %p57 = scmp.ne.s32.totalorder %s49, %s51
      %p58 = scmp.eq.s32.totalorder %s20, 1
      %p59 = por %p57, %p58
      %p60 = scmp.ne.s32.totalorder %s51, %s52
      %p61 = scmp.eq.s32.totalorder %s20, 0
      %p62 = por %p60, %p61
      %p63 = scmp.ne.s32.totalorder %s51, %s52
      %p64 = scmp.eq.s32.totalorder %s21, 1
      %p65 = por %p63, %p64
      %p67 = scmp.ne.s32.totalorder %s52, %s66
      %p68 = scmp.eq.s32.totalorder %s21, 0
      %p69 = por %p67, %p68
      %s70 = ssub.s32 %s15, %s22
      %p71 = scmp.eq.s32.totalorder %s70, 0
      %s73 = sadd.s32 %s72, 1
      %s74 = scalar_select %p71, %s72, %s73
      %p77 = pneg %p71
      %p78 = scmp.eq.s32.totalorder %s15, 1
      %p79 = por %p77, %p78
      %p80 = scmp.ne.s32.totalorder %s72, %s75
      %p81 = scmp.eq.s32.totalorder %s15, 0
      %p82 = por %p80, %p81
      %p83 = scmp.ne.s32.totalorder %s72, %s75
      %p84 = scmp.eq.s32.totalorder %s20, 1
      %p85 = por %p83, %p84
      %p86 = scmp.ne.s32.totalorder %s75, %s76
      %p87 = scmp.eq.s32.totalorder %s20, 0
      %p88 = por %p86, %p87
      %p89 = scmp.ne.s32.totalorder %s75, %s76
      %p90 = scmp.eq.s32.totalorder %s21, 1
      %p91 = por %p89, %p90
      %p93 = scmp.ne.s32.totalorder %s76, %s92
      %p94 = scmp.eq.s32.totalorder %s21, 0
      %p95 = por %p93, %p94
      %p96 = scmp.le.s32.totalorder 1, %s15
      %p97 = scmp.lt.s32.totalorder %s15, 3
      %p98 = pnand %p96, %p97
      %p99 = pneg %p98
      // Predicated region
      $region9: #{tpu_custom_call.1} parent=5 // pred_check
        _
      $region10: #{tpu_custom_call.1} parent=5 // pred_check_branch
        %101 = sbr.rel (%p98) target = $region12
      $region11: #{tpu_custom_call.1} parent=5 // pred_region
        %s102 = ssub.s32 %s15, 1
        // Predicated region
        $region13: #{tpu_custom_call.1} parent=11 // pred_check
          %p103 = pneg %p62
        $region14: #{tpu_custom_call.1} parent=11 // pred_check_branch
          %105 = sbr.rel (%p103) target = $region16
        $region15: #{tpu_custom_call.1} parent=11 // pred_region
          %107 = vsyncadd [#allocation6], 0
          %s109 = sshll.u32 %s1, 4
          %s110 = int_to_ptr.hbm [resolvable:$true] %s109
          %s111 = sshll.u32 [#allocation5], 4
          %s112 = int_to_ptr.vmem [resolvable:$true] %s111
          %114 = dma.hbm_to_vmem [thread:$0]  %s110, 32, %s112, [#allocation6]
        $region16: #{tpu_custom_call.1} parent=11 // pred_fallthru
          _
      $region12: #{tpu_custom_call.1} parent=5 // pred_fallthru
        _
      %p115 = scmp.lt.s32.totalorder %s15, 2
      // Predicated region
      $region17: #{tpu_custom_call.1} parent=5 // pred_check
        %p116 = pneg %p115
      $region18: #{tpu_custom_call.1} parent=5 // pred_check_branch
        %118 = sbr.rel (%p116) target = $region20
      $region19: #{tpu_custom_call.1} parent=5 // pred_region
        // Predicated region
        $region21: #{tpu_custom_call.1} parent=19 // pred_check
          %p119 = pneg %p35
        $region22: #{tpu_custom_call.1} parent=19 // pred_check_branch
          %121 = sbr.rel (%p119) target = $region24
        $region23: #{tpu_custom_call.1} parent=19 // pred_region
          %s122 = sand.u32 %s25, 1
          %s123 = scalar_lea.sflag [#allocation3], %s122
          %s124 = sand.u32 %s25, 1
          %s125 = smul.addr %s124, 8
          %s126 = scalar_lea.vmem [#allocation2], %s125
          %128 = vsyncadd %s123, 0
          %s129 = smul.addr %s15, 8
          %s130 = scalar_lea.hbm %s0, %s129
          %s132 = sshll.u32 %s130, 4
          %s133 = int_to_ptr.hbm [resolvable:$true] %s132
          %s134 = sshll.u32 %s126, 4
          %s135 = int_to_ptr.vmem [resolvable:$true] %s134
          %137 = dma.hbm_to_vmem [thread:$0]  %s133, 128, %s135, %s123
        $region24: #{tpu_custom_call.1} parent=19 // pred_fallthru
          _
      $region20: #{tpu_custom_call.1} parent=5 // pred_fallthru
        _
      %p138 = scmp.le.s32.totalorder 1, %s15
      %p139 = scmp.lt.s32.totalorder %s15, 3
      %p140 = pnand %p138, %p139
      %p141 = pneg %p140
      // Predicated region
      $region25: #{tpu_custom_call.1} parent=5 // pred_check
        _
      $region26: #{tpu_custom_call.1} parent=5 // pred_check_branch
        %143 = sbr.rel (%p140) target = $region28
      $region27: #{tpu_custom_call.1} parent=5 // pred_region
        %s144 = ssub.s32 %s15, 1
        %s145 = sand.u32 %s28, 1
        %s146 = scalar_lea.sflag [#allocation3], %s145
        %s147 = sand.u32 %s28, 1
        %s148 = smul.addr %s147, 8
        %s149 = scalar_lea.vmem [#allocation2], %s148
        // Predicated region
        $region29: #{tpu_custom_call.1} parent=27 // pred_check
          %p150 = pneg %p41
        $region30: #{tpu_custom_call.1} parent=27 // pred_check_branch
          %152 = sbr.rel (%p150) target = $region32
        $region31: #{tpu_custom_call.1} parent=27 // pred_region
          %154 = dma.done %s146, 128
        $region32: #{tpu_custom_call.1} parent=27 // pred_fallthru
          _
        // Predicated region
        $region33: #{tpu_custom_call.1} parent=27 // pred_check
          %p155 = pneg %p62
        $region34: #{tpu_custom_call.1} parent=27 // pred_check_branch
          %157 = sbr.rel (%p155) target = $region36
        $region35: #{tpu_custom_call.1} parent=27 // pred_region
          %159 = dma.done [#allocation6], 32
        $region36: #{tpu_custom_call.1} parent=27 // pred_fallthru
          _
        %s160 = sand.u32 %s28, 1
        %s161 = scalar_lea.sflag [#allocation3], %s160
        %s162 = sand.u32 %s28, 1
        %s163 = smul.addr %s162, 8
        %s164 = scalar_lea.vmem [#allocation2], %s163
        %p165 = pneg %p41
        %p166 = pneg %p38
        %p167 = pneg %p62
        %p168 = pneg %p59
        %p169 = pneg %p88
        %p170 = pneg %p85
        %s171 = sand.u32 %s75, 1
        %s172 = scalar_lea.sflag [#allocation4], %s171
        %s173 = sand.u32 %s75, 1
        %s174 = smul.addr %s173, 8
        %s175 = scalar_lea.vmem [#allocation7], %s174
        %v176 = vld [vmem:[%s149] sm:$0xff]
        %177 = vadd.xlane.f32.xlu0 %v176
        %v178 = vpop.xlane.xlu0 %177
        %v179 = vmul.f32 %v178, 0.0078125
        %v180 = vsub.f32 %v176, %v179
        %v181 = vmul.f32 %v180, %v180
        %182 = vadd.xlane.f32.xlu0 %v181
        %v183 = vpop.xlane.xlu0 %182
        %v184 = vmul.f32 %v183, 0.0078125
        %v185 = vadd.f32 %v184, 1e-05
        %v186 = vrsqrt.pop %v185
        %v187 = vmul.f32 %v186, %v185
        %v188 = vmul.f32 %v187, %v186
        %v189 = vmul.f32 0.5, %v188
        %v190 = vsub.f32 1.5, %v189
        %v191 = vmul.f32 %v186, %v190
        %vm192 = vweird.f32 %v185
        %vm193 = vweird.f32 %v186
        %vm194 = vmor %vm192, %vm193
        %v195 = vsel %vm194, %v186, %v191
        %v196 = vmul.f32 %v180, %v195
        %v197 = vld [vmem:[#allocation5] sm:$0x1]
        %v198 = vperm.slane %v197, 0
        %v199 = vmul.f32 %v196, %v198
        %v200 = vld [vmem:[#allocation5 + $0x1] sm:$0x1]
        %v201 = vperm.slane %v200, 0
        %v202 = vadd.f32 %v199, %v201
        %203 = vst [vmem:[%s175] sm:$0xff] %v202
        %s204 = sand.u32 %s75, 1
        %s205 = scalar_lea.sflag [#allocation4], %s204
        %s206 = sand.u32 %s75, 1
        %s207 = smul.addr %s206, 8
        %s208 = scalar_lea.vmem [#allocation7], %s207
        // Predicated region
        $region37: #{tpu_custom_call.1} parent=27 // pred_check
          %p209 = pneg %p85
        $region38: #{tpu_custom_call.1} parent=27 // pred_check_branch
          %211 = sbr.rel (%p209) target = $region40
        $region39: #{tpu_custom_call.1} parent=27 // pred_region
          %213 = vsyncadd %s205, 0
          %s214 = smul.addr %s20, 8
          %s215 = scalar_lea.hbm %s2, %s214
          %s217 = sshll.u32 %s208, 4
          %s218 = int_to_ptr.vmem [resolvable:$true] %s217
          %s219 = sshll.u32 %s215, 4
          %s220 = int_to_ptr.hbm [resolvable:$true] %s219
          %222 = dma.vmem_to_hbm [thread:$0]  %s218, 128, %s220, %s205
        $region40: #{tpu_custom_call.1} parent=27 // pred_fallthru
          _
      $region28: #{tpu_custom_call.1} parent=5 // pred_fallthru
        _
      %p223 = scmp.le.s32.totalorder 2, %s15
      // Predicated region
      $region41: #{tpu_custom_call.1} parent=5 // pred_check
        %p224 = pneg %p223
      $region42: #{tpu_custom_call.1} parent=5 // pred_check_branch
        %226 = sbr.rel (%p224) target = $region44
      $region43: #{tpu_custom_call.1} parent=5 // pred_region
        %s227 = ssub.s32 %s15, 2
        // Predicated region
        $region45: #{tpu_custom_call.1} parent=43 // pred_check
          %p228 = pneg %p91
        $region46: #{tpu_custom_call.1} parent=43 // pred_check_branch
          %230 = sbr.rel (%p228) target = $region48
        $region47: #{tpu_custom_call.1} parent=43 // pred_region
          %s231 = sand.u32 %s76, 1
          %s232 = scalar_lea.sflag [#allocation4], %s231
          %s233 = sand.u32 %s76, 1
          %s234 = smul.addr %s233, 8
          %s235 = scalar_lea.vmem [#allocation7], %s234
          %237 = dma.done %s232, 128
        $region48: #{tpu_custom_call.1} parent=43 // pred_fallthru
          _
      $region44: #{tpu_custom_call.1} parent=5 // pred_fallthru
        _
    $region6: #{tpu_custom_call.1} parent=1 // loop_footer
      %s19 = sadd.s32 1, %s15
    $region7: #{tpu_custom_call.1} parent=1 // loop_footer_branch
      %14 = sbr.rel target = $region3
    $region8: #{tpu_custom_call.1} parent=1 // loop_exit
      _
    %238 = vsyncpa [#allocation3], 1
    %s239 = scalar_lea.sflag [#allocation3], 1
    %240 = vsyncpa %s239, 1
    %241 = vsyncpa [#allocation6], 1
    %242 = vsyncpa [#allocation4], 1
    %s243 = scalar_lea.sflag [#allocation4], 1
    %244 = vsyncpa %s243, 1

</llo_original>
